<compile_context>
chip_gen: v5e
topology: v5e:2x2
jax: 0.10.0
libtpu: 0.0.40
codegen_flags: <defaults>
</compile_context>

<pallas_src>
import math

import jax
import jax.numpy as jnp
from jax.experimental import pallas as pl
from jax.experimental.pallas import tpu as pltpu


def _round_up(n, m):
    return ((n + m - 1) // m) * m


def edge_encoder_mlp_kernel(x_ref, w1_ref, b1_ref, w2_ref, b2_ref, o_ref):
    """Fused two-layer MLP on one batch tile: relu(x@W1 + b1) @ W2 + b2."""
    x = x_ref[...].astype(w1_ref.dtype)                               # in-kernel bf16 cast
    h = jnp.dot(x, w1_ref[...], preferred_element_type=jnp.float32)   # (TB, Hp) f32
    h = jnp.maximum(h + b1_ref[...], 0.0)                             # bias + ReLU in f32
    h = h.astype(w2_ref.dtype)                                        # bf16 for 2nd MXU pass
    y = jnp.dot(h, w2_ref[...], preferred_element_type=jnp.float32)   # (TB, O) f32
    y = y + b2_ref[...]
    o_ref[...] = y.astype(o_ref.dtype)


def prepare_params(w1, b1, w2, b2, compute_dtype=jnp.bfloat16):
    """One-time parameter prep (hoisted out of the per-call path):
       cast weights to bf16, biases to f32, pad hidden width to a multiple
       of 128 (zero padding is mathematically inert)."""
    E, H = w1.shape
    O = w2.shape[1]
    Hp = _round_up(H, 128)
    if Hp == H:
        w1p = w1.astype(compute_dtype)
        b1p = b1.reshape(1, H).astype(jnp.float32)
        w2p = w2.astype(compute_dtype)
    else:
        w1p = jnp.zeros((E, Hp), compute_dtype).at[:, :H].set(w1.astype(compute_dtype))
        b1p = jnp.zeros((1, Hp), jnp.float32).at[:, :H].set(
            b1.reshape(1, H).astype(jnp.float32))
        w2p = jnp.zeros((Hp, O), compute_dtype).at[:H, :].set(w2.astype(compute_dtype))
    b2p = b2.reshape(1, O).astype(jnp.float32)
    return w1p, b1p, w2p, b2p


def _mlp_call(x, w1p, b1p, w2p, b2p, TB, out_dtype, cost, weight_pipeline_mode):
    B, E = x.shape
    Hp = w1p.shape[1]
    O = w2p.shape[1]

    if weight_pipeline_mode is None:
        def const(shape):
            return pl.BlockSpec(shape, lambda i: (0, 0))
    else:
        def const(shape):
            return pl.BlockSpec(shape, lambda i: (0, 0),
                                pipeline_mode=weight_pipeline_mode)

    return pl.pallas_call(
        edge_encoder_mlp_kernel,
        out_shape=jax.ShapeDtypeStruct((B, O), out_dtype),
        grid=(pl.cdiv(B, TB),),
        in_specs=[
            pl.BlockSpec((TB, E), lambda i: (i, 0)),   # x tile (double-buffered)
            const((E, Hp)),                            # W1 resident in VMEM
            const((1, Hp)),                            # b1 resident (f32)
            const((Hp, O)),                            # W2 resident in VMEM
            const((1, O)),                             # b2 resident (f32)
        ],
        out_specs=pl.BlockSpec((TB, O), lambda i: (i, 0)),
        compiler_params=pltpu.CompilerParams(
            dimension_semantics=("parallel",)),
        cost_estimate=cost,
    )(x, w1p, b1p, w2p, b2p)


def edge_encoder_mlp(x, params, node_features, *,
                     block_rows=256,
                     out_dtype=jnp.bfloat16):
    """x: (B, edge_features), params from prepare_params() -> (B, nf, nf)."""
    w1p, b1p, w2p, b2p = params
    B, E = x.shape
    Ew, Hp = w1p.shape
    O = w2p.shape[1]
    assert Ew == E
    assert O == node_features * node_features

    # Batch tile: full extent for small B, capped at block_rows (VMEM-friendly
    # for v5e/v7x) otherwise; split into >=2 tiles when possible so the
    # "parallel" axis can feed both TensorCores on v7x.
    TB = min(block_rows, B)
    if TB == B and B > 16:
        TB = _round_up(pl.cdiv(B, 2), 8)
    if TB < B:
        TB = _round_up(TB, 8)

    cost = pl.CostEstimate(
        flops=2 * B * (E * Hp + Hp * O),
        transcendentals=0,
        bytes_accessed=int(
            B * E * x.dtype.itemsize
            + w1p.size * w1p.dtype.itemsize + b1p.size * b1p.dtype.itemsize
            + w2p.size * w2p.dtype.itemsize + b2p.size * b2p.dtype.itemsize
            + B * O * jnp.dtype(out_dtype).itemsize),
    )

    try:
        # Single-buffer the constant-index weight/bias blocks (halves their
        # VMEM footprint; they are DMA'd once and stay resident).
        out_flat = _mlp_call(x, w1p, b1p, w2p, b2p, TB, out_dtype, cost,
                             weight_pipeline_mode=pl.Buffered(1))
    except Exception:
        # Fallback for Pallas builds without pipeline_mode support.
        out_flat = _mlp_call(x, w1p, b1p, w2p, b2p, TB, out_dtype, cost,
                             weight_pipeline_mode=None)

    # Plain-JAX metadata reshape (no compute, no extra HBM pass).
    return out_flat.reshape(B, node_features, node_features)


def init_params(key, edge_features, node_features, dtype=jnp.float32):
    """Deterministic init mirroring MyLinear.reset_parameters:
       uniform(-stdv, stdv) with stdv = 1/sqrt(out_features)."""
    out_features = node_features * node_features
    hidden = (edge_features + out_features) // 2

    k1, k2, k3, k4 = jax.random.split(key, 4)

    stdv1 = 1.0 / math.sqrt(hidden)
    w1 = jax.random.uniform(k1, (edge_features, hidden), dtype,
                            minval=-stdv1, maxval=stdv1)
    b1 = jax.random.uniform(k2, (1, hidden), dtype,
                            minval=-stdv1, maxval=stdv1)

    stdv2 = 1.0 / math.sqrt(out_features)
    w2 = jax.random.uniform(k3, (hidden, out_features), dtype,
                            minval=-stdv2, maxval=stdv2)
    b2 = jax.random.uniform(k4, (1, out_features), dtype,
                            minval=-stdv2, maxval=stdv2)

    return w1, b1, w2, b2


if __name__ == "__main__":
    # Small shapes consistent with the module: batch of edges x edge features.
    B = 8                 # number of edges
    edge_features = 32
    node_features = 8     # -> out_features = 64, hidden = (32 + 64) // 2 = 48

    key = jax.random.PRNGKey(0)
    kx, kp = jax.random.split(key)

    x = jax.random.normal(kx, (B, edge_features), jnp.float32)
    w1, b1, w2, b2 = init_params(kp, edge_features, node_features)

    # One-time param prep (outside the per-call / per-step path).
    params = prepare_params(w1, b1, w2, b2)

    out = edge_encoder_mlp(x, params, node_features)
    out = jax.block_until_ready(out)

    # Pure-JAX f32 reference of the same forward pass (kernel uses bf16
    # inputs/weights/output with f32 accumulation, hence the loose tolerance).
    ref = jnp.maximum(x @ w1 + b1, 0.0) @ w2 + b2
    ref = ref.reshape(B, node_features, node_features)

    assert out.shape == (B, node_features, node_features)
    assert jnp.allclose(out.astype(jnp.float32), ref, atol=3e-2, rtol=3e-2)

    print("KERNEL_OK")
</pallas_src>

<mosaic_0001>
module attributes {stable_mosaic.version = 11 : i64} {
  func.func @edge_encoder_mlp_kernel(%arg0: i32, %arg1: memref<8x32xf32, #tpu.memory_space<vmem>>, %arg2: memref<32x128xbf16, #tpu.memory_space<vmem>>, %arg3: memref<1x128xf32, #tpu.memory_space<vmem>>, %arg4: memref<128x64xbf16, #tpu.memory_space<vmem>>, %arg5: memref<1x64xf32, #tpu.memory_space<vmem>>, %arg6: memref<8x64xbf16, #tpu.memory_space<vmem>>) attributes {dimension_semantics = [#tpu.dimension_semantics<parallel>], iteration_bounds = array<i64: 1>, scalar_prefetch = 0 : i64, scratch_operands = 0 : i64, tpu.core_type = #tpu.core_type<tc>, window_params = [{transform_indices = @transform_0, window_bounds = array<i64: 8, 32>}, {pipeline_mode = #tpu.pipeline_mode<synchronous>, transform_indices = @transform_1, window_bounds = array<i64: 32, 128>}, {pipeline_mode = #tpu.pipeline_mode<synchronous>, transform_indices = @transform_2, window_bounds = array<i64: 1, 128>}, {pipeline_mode = #tpu.pipeline_mode<synchronous>, transform_indices = @transform_3, window_bounds = array<i64: 128, 64>}, {pipeline_mode = #tpu.pipeline_mode<synchronous>, transform_indices = @transform_4, window_bounds = array<i64: 1, 64>}, {transform_indices = @transform_5, window_bounds = array<i64: 8, 64>}]} {
    %c0 = arith.constant 0 : index
    %c0_0 = arith.constant 0 : index
    %0 = vector.load %arg1[%c0, %c0_0] : memref<8x32xf32, #tpu.memory_space<vmem>>, vector<8x32xf32>
    %1 = arith.truncf %0 : vector<8x32xf32> to vector<8x32xbf16>
    %c0_1 = arith.constant 0 : index
    %c0_2 = arith.constant 0 : index
    %2 = vector.load %arg2[%c0_1, %c0_2] : memref<32x128xbf16, #tpu.memory_space<vmem>>, vector<32x128xbf16>
    %cst = arith.constant dense<0.000000e+00> : vector<8x128xf32>
    %3 = tpu.matmul %1, %2, %cst {dimension_numbers = #tpu.dot_dimension_numbers<[1], [0], [0], [1], [0, 0, 1, 1], [], []>} : vector<8x32xbf16>, vector<32x128xbf16>, vector<8x128xf32> -> vector<8x128xf32>
    %c0_3 = arith.constant 0 : index
    %c0_4 = arith.constant 0 : index
    %4 = vector.load %arg3[%c0_3, %c0_4] : memref<1x128xf32, #tpu.memory_space<vmem>>, vector<1x128xf32>
    %5 = vector.broadcast %4 : vector<1x128xf32> to vector<8x128xf32>
    %6 = arith.addf %3, %5 : vector<8x128xf32>
    %cst_5 = arith.constant 0.000000e+00 : f32
    %7 = vector.broadcast %cst_5 : f32 to vector<8x128xf32>
    %8 = arith.maximumf %6, %7 : vector<8x128xf32>
    %9 = arith.truncf %8 : vector<8x128xf32> to vector<8x128xbf16>
    %c0_6 = arith.constant 0 : index
    %c0_7 = arith.constant 0 : index
    %10 = vector.load %arg4[%c0_6, %c0_7] : memref<128x64xbf16, #tpu.memory_space<vmem>>, vector<128x64xbf16>
    %cst_8 = arith.constant dense<0.000000e+00> : vector<8x64xf32>
    %11 = tpu.matmul %9, %10, %cst_8 {dimension_numbers = #tpu.dot_dimension_numbers<[1], [0], [0], [1], [0, 0, 1, 1], [], []>} : vector<8x128xbf16>, vector<128x64xbf16>, vector<8x64xf32> -> vector<8x64xf32>
    %c0_9 = arith.constant 0 : index
    %c0_10 = arith.constant 0 : index
    %12 = vector.load %arg5[%c0_9, %c0_10] : memref<1x64xf32, #tpu.memory_space<vmem>>, vector<1x64xf32>
    %13 = vector.broadcast %12 : vector<1x64xf32> to vector<8x64xf32>
    %14 = arith.addf %11, %13 : vector<8x64xf32>
    %15 = arith.truncf %14 : vector<8x64xf32> to vector<8x64xbf16>
    %c0_11 = arith.constant 0 : index
    %c0_12 = arith.constant 0 : index
    %16 = vector.load %arg6[%c0_11, %c0_12] : memref<8x64xbf16, #tpu.memory_space<vmem>>, vector<8x64xbf16>
    tpu.vector_store %arg6[%c0_11, %c0_12], %15 {strides = array<i32>} : memref<8x64xbf16, #tpu.memory_space<vmem>>, vector<8x64xbf16>,
    return
  }
  func.func @transform_0(%arg0: i32) -> (i32, i32) {
    %c0_i32 = arith.constant 0 : i32
    %c0_i32_0 = arith.constant 0 : i32
    return %arg0, %c0_i32 : i32, i32
  }
  func.func @transform_1(%arg0: i32) -> (i32, i32) {
    %c0_i32 = arith.constant 0 : i32
    %c0_i32_0 = arith.constant 0 : i32
    %c0_i32_1 = arith.constant 0 : i32
    return %c0_i32, %c0_i32_0 : i32, i32
  }
  func.func @transform_2(%arg0: i32) -> (i32, i32) {
    %c0_i32 = arith.constant 0 : i32
    %c0_i32_0 = arith.constant 0 : i32
    %c0_i32_1 = arith.constant 0 : i32
    return %c0_i32, %c0_i32_0 : i32, i32
  }
  func.func @transform_3(%arg0: i32) -> (i32, i32) {
    %c0_i32 = arith.constant 0 : i32
    %c0_i32_0 = arith.constant 0 : i32
    %c0_i32_1 = arith.constant 0 : i32
    return %c0_i32, %c0_i32_0 : i32, i32
  }
  func.func @transform_4(%arg0: i32) -> (i32, i32) {
    %c0_i32 = arith.constant 0 : i32
    %c0_i32_0 = arith.constant 0 : i32
    %c0_i32_1 = arith.constant 0 : i32
    return %c0_i32, %c0_i32_0 : i32, i32
  }
  func.func @transform_5(%arg0: i32) -> (i32, i32) {
    %c0_i32 = arith.constant 0 : i32
    %c0_i32_0 = arith.constant 0 : i32
    return %arg0, %c0_i32 : i32, i32
  }
}

module attributes {stable_mosaic.version = 11 : i64} {
  func.func @edge_encoder_mlp_kernel(%arg0: i32, %arg1: memref<8x32xf32, #tpu.memory_space<vmem>>, %arg2: memref<32x128xbf16, #tpu.memory_space<vmem>>, %arg3: memref<1x128xf32, #tpu.memory_space<vmem>>, %arg4: memref<128x64xbf16, #tpu.memory_space<vmem>>, %arg5: memref<1x64xf32, #tpu.memory_space<vmem>>, %arg6: memref<8x64xbf16, #tpu.memory_space<vmem>>) attributes {dimension_semantics = [#tpu.dimension_semantics<parallel>], iteration_bounds = array<i64: 1>, scalar_prefetch = 0 : i64, scratch_operands = 0 : i64, tpu.core_type = #tpu.core_type<tc>, window_params = [{transform_indices = @transform_0, window_bounds = array<i64: 8, 32>}, {pipeline_mode = #tpu.pipeline_mode<synchronous>, transform_indices = @transform_1, window_bounds = array<i64: 32, 128>}, {pipeline_mode = #tpu.pipeline_mode<synchronous>, transform_indices = @transform_2, window_bounds = array<i64: 1, 128>}, {pipeline_mode = #tpu.pipeline_mode<synchronous>, transform_indices = @transform_3, window_bounds = array<i64: 128, 64>}, {pipeline_mode = #tpu.pipeline_mode<synchronous>, transform_indices = @transform_4, window_bounds = array<i64: 1, 64>}, {transform_indices = @transform_5, window_bounds = array<i64: 8, 64>}]} {
    %c0 = arith.constant 0 : index
    %c0_0 = arith.constant 0 : index
    %0 = vector.load %arg1[%c0, %c0_0] : memref<8x32xf32, #tpu.memory_space<vmem>>, vector<8x32xf32>
    %1 = arith.truncf %0 : vector<8x32xf32> to vector<8x32xbf16>
    %c0_1 = arith.constant 0 : index
    %c0_2 = arith.constant 0 : index
    %2 = vector.load %arg2[%c0_1, %c0_2] : memref<32x128xbf16, #tpu.memory_space<vmem>>, vector<32x128xbf16>
    %cst = arith.constant dense<0.000000e+00> : vector<8x128xf32>
    %3 = tpu.matmul %1, %2, %cst {dimension_numbers = #tpu.dot_dimension_numbers<[1], [0], [0], [1], [0, 0, 1, 1], [], []>} : vector<8x32xbf16>, vector<32x128xbf16>, vector<8x128xf32> -> vector<8x128xf32>
    %c0_3 = arith.constant 0 : index
    %c0_4 = arith.constant 0 : index
    %4 = vector.load %arg3[%c0_3, %c0_4] : memref<1x128xf32, #tpu.memory_space<vmem>>, vector<1x128xf32>
    %5 = vector.broadcast %4 : vector<1x128xf32> to vector<8x128xf32>
    %6 = arith.addf %3, %5 : vector<8x128xf32>
    %cst_5 = arith.constant 0.000000e+00 : f32
    %7 = vector.broadcast %cst_5 : f32 to vector<8x128xf32>
    %8 = arith.maximumf %6, %7 : vector<8x128xf32>
    %9 = arith.truncf %8 : vector<8x128xf32> to vector<8x128xbf16>
    %c0_6 = arith.constant 0 : index
    %c0_7 = arith.constant 0 : index
    %10 = vector.load %arg4[%c0_6, %c0_7] : memref<128x64xbf16, #tpu.memory_space<vmem>>, vector<128x64xbf16>
    %cst_8 = arith.constant dense<0.000000e+00> : vector<8x64xf32>
    %11 = tpu.matmul %9, %10, %cst_8 {dimension_numbers = #tpu.dot_dimension_numbers<[1], [0], [0], [1], [0, 0, 1, 1], [], []>} : vector<8x128xbf16>, vector<128x64xbf16>, vector<8x64xf32> -> vector<8x64xf32>
    %c0_9 = arith.constant 0 : index
    %c0_10 = arith.constant 0 : index
    %12 = vector.load %arg5[%c0_9, %c0_10] : memref<1x64xf32, #tpu.memory_space<vmem>>, vector<1x64xf32>
    %13 = vector.broadcast %12 : vector<1x64xf32> to vector<8x64xf32>
    %14 = arith.addf %11, %13 : vector<8x64xf32>
    %15 = arith.truncf %14 : vector<8x64xf32> to vector<8x64xbf16>
    %c0_11 = arith.constant 0 : index
    %c0_12 = arith.constant 0 : index
    %16 = vector.load %arg6[%c0_11, %c0_12] : memref<8x64xbf16, #tpu.memory_space<vmem>>, vector<8x64xbf16>
    tpu.vector_store %arg6[%c0_11, %c0_12], %15 {strides = array<i32>} : memref<8x64xbf16, #tpu.memory_space<vmem>>, vector<8x64xbf16>,
    return
  }
  func.func @transform_0(%arg0: i32) -> (i32, i32) {
    %c0_i32 = arith.constant 0 : i32
    %c0_i32_0 = arith.constant 0 : i32
    return %arg0, %c0_i32 : i32, i32
  }
  func.func @transform_1(%arg0: i32) -> (i32, i32) {
    %c0_i32 = arith.constant 0 : i32
    %c0_i32_0 = arith.constant 0 : i32
    %c0_i32_1 = arith.constant 0 : i32
    return %c0_i32, %c0_i32_0 : i32, i32
  }
  func.func @transform_2(%arg0: i32) -> (i32, i32) {
    %c0_i32 = arith.constant 0 : i32
    %c0_i32_0 = arith.constant 0 : i32
    %c0_i32_1 = arith.constant 0 : i32
    return %c0_i32, %c0_i32_0 : i32, i32
  }
  func.func @transform_3(%arg0: i32) -> (i32, i32) {
    %c0_i32 = arith.constant 0 : i32
    %c0_i32_0 = arith.constant 0 : i32
    %c0_i32_1 = arith.constant 0 : i32
    return %c0_i32, %c0_i32_0 : i32, i32
  }
  func.func @transform_4(%arg0: i32) -> (i32, i32) {
    %c0_i32 = arith.constant 0 : i32
    %c0_i32_0 = arith.constant 0 : i32
    %c0_i32_1 = arith.constant 0 : i32
    return %c0_i32, %c0_i32_0 : i32, i32
  }
  func.func @transform_5(%arg0: i32) -> (i32, i32) {
    %c0_i32 = arith.constant 0 : i32
    %c0_i32_0 = arith.constant 0 : i32
    return %arg0, %c0_i32 : i32, i32
  }
}

</mosaic_0001>

<llo_original>
// kernel: tpu_custom_call.1
$region0: #{tpu_custom_call.1}
  #allocation0 [shape = 'u32[]', space=smem, size = 0x4, offset = 0x4, fixed_abs, tag = 'smem constant byte address 0x4 - core index']
  #allocation1 [shape = 'u32[72,128]{1,0:T(1,128)}', space=vmem, size = 0x9000, scoped, tag = 'internal scratch']
  %s0 = inlined_call_operand.vmem [shape: f32[8,32], index: 0, kind: input, shape index: {}]
  %s1 = inlined_call_operand.vmem [shape: bf16[32,128], index: 1, kind: input, shape index: {}]
  %s2 = inlined_call_operand.vmem [shape: f32[1,128], index: 2, kind: input, shape index: {}]
  %s3 = inlined_call_operand.vmem [shape: bf16[128,64], index: 3, kind: input, shape index: {}]
  %s4 = inlined_call_operand.vmem [shape: f32[1,64], index: 4, kind: input, shape index: {}]
  %s5 = inlined_call_operand.hbm [shape: bf16[8,64], index: 5, kind: output, shape index: {}]
  %s6 = sld [smem:[#allocation0]]
  $region30: #{tpu_custom_call.1} parent=0
    _
  %s8 = ssub.s32 1, %s6
  %s9 = scalar_select 0, %s8, %s6
  $region1: #{tpu_custom_call.1} parent=0
    #allocation2 [shape = 'u8[2048]{0}', space=vmem, size = 0x800, scoped, tag = 'output window, operand 0, single buffered']
    #allocation3 [shape = 's32[1]{0}', space=sflag, size = 0x4, scoped, tag = 'scoped memory for tpu_custom_call.1']
    %10 = vsyncpa [#allocation3], 0
    // Predicated region
    $region2: #{tpu_custom_call.1} parent=1 // pred_check
      _
    $region3: #{tpu_custom_call.1} parent=1 // pred_check_branch
      %12 = sbr.rel (0) target = $region5
    $region4: #{tpu_custom_call.1} parent=1 // pred_region
      _
    $region5: #{tpu_custom_call.1} parent=1 // pred_fallthru
      _
    // Predicated region
    $region6: #{tpu_custom_call.1} parent=1 // pred_check
      _
    $region7: #{tpu_custom_call.1} parent=1 // pred_check_branch
      %14 = sbr.rel (0) target = $region9
    $region8: #{tpu_custom_call.1} parent=1 // pred_region
      _
    $region9: #{tpu_custom_call.1} parent=1 // pred_fallthru
      _
    // Predicated region
    $region10: #{tpu_custom_call.1} parent=1 // pred_check
      _
    $region11: #{tpu_custom_call.1} parent=1 // pred_check_branch
      %16 = sbr.rel (0) target = $region13
    $region12: #{tpu_custom_call.1} parent=1 // pred_region
      _
    $region13: #{tpu_custom_call.1} parent=1 // pred_fallthru
      _
    // Predicated region
    $region14: #{tpu_custom_call.1} parent=1 // pred_check
      _
    $region15: #{tpu_custom_call.1} parent=1 // pred_check_branch
      %18 = sbr.rel (0) target = $region17
    $region16: #{tpu_custom_call.1} parent=1 // pred_region
      _
    $region17: #{tpu_custom_call.1} parent=1 // pred_fallthru
      _
    // Predicated region
    $region18: #{tpu_custom_call.1} parent=1 // pred_check
      _
    $region19: #{tpu_custom_call.1} parent=1 // pred_check_branch
      %20 = sbr.rel (0) target = $region21
    $region20: #{tpu_custom_call.1} parent=1 // pred_region
      _
    $region21: #{tpu_custom_call.1} parent=1 // pred_fallthru
      _
    %v22 = vld [vmem:[%s0] sm:$0xff]
    %v23 = vpack.c.bf16 %v22, %v22
    %v24 = vld [vmem:[%s1] sm:$0xf]
    %v25 = vld [vmem:[%s1 + $0x4] sm:$0xf]
    %v26 = vld [vmem:[%s1 + $0x8] sm:$0xf]
    %v27 = vld [vmem:[%s1 + $0xc] sm:$0xf]
    %v28 = vld [vmem:[%s2] sm:$0x1]
    %v30 = vperm.slane %v28, 0
    %v36 = vunpack.c.l.b16 %v24
    %v37 = vunpack.c.l.b16 %v25
    %v38 = vunpack.c.l.b16 %v26
    %v39 = vunpack.c.l.b16 %v27
    %v40 = vpack.c.b16 %v37, %v36
    %v41 = vpack.c.b16 %v39, %v38
    %vm44 = vcmask 261120
    %v46 = vsel %vm44, %v23, 0
    %48 = vmatpush.bf16.msra.mxu0 0
    %49 = vmatpush.bf16.msra.mxu0 0
    %50 = vmatpush.bf16.msra.mxu0 0
    %51 = vmatpush.bf16.msra.mxu0 0
    %52 = vmatpush.bf16.msra.mxu0 0
    %53 = vmatpush.bf16.msra.mxu0 0
    %54 = vmatpush.bf16.msra.mxu0 %v41
    %55 = vmatpush.bf16.msra.mxu0 %v40
    %56 = vmatmul.bf16.gmra.mxu0 %v46
    %v57 = vpop.f32.mrf.mxu0
    %v58 = vadd.f32 %v30, %v57
    %v59 = vpop.f32.mrf.mxu0
    %60 = vdwg.mxu0
    %v61 = vmax.f32 %v58, 0.0
    %v62 = vpack.c.bf16 %v61, %v61
    %v63 = vld [vmem:[%s3] sm:$0xf]
    %v64 = vld [vmem:[%s3 + $0x4] sm:$0xf]
    %v65 = vld [vmem:[%s3 + $0x8] sm:$0xf]
    %v66 = vld [vmem:[%s3 + $0xc] sm:$0xf]
    %v67 = vld [vmem:[%s3 + $0x10] sm:$0xf]
    %v68 = vld [vmem:[%s3 + $0x14] sm:$0xf]
    %v69 = vld [vmem:[%s3 + $0x18] sm:$0xf]
    %v70 = vld [vmem:[%s3 + $0x1c] sm:$0xf]
    %v71 = vld [vmem:[%s3 + $0x20] sm:$0xf]
    %v72 = vld [vmem:[%s3 + $0x24] sm:$0xf]
    %v73 = vld [vmem:[%s3 + $0x28] sm:$0xf]
    %v74 = vld [vmem:[%s3 + $0x2c] sm:$0xf]
    %v75 = vld [vmem:[%s3 + $0x30] sm:$0xf]
    %v76 = vld [vmem:[%s3 + $0x34] sm:$0xf]
    %v77 = vld [vmem:[%s3 + $0x38] sm:$0xf]
    %v78 = vld [vmem:[%s3 + $0x3c] sm:$0xf]
    %v79 = vld [vmem:[%s4] sm:$0x1]
    %v81 = vperm.slane %v79, 0
    %v99 = vunpack.c.l.b16 %v63
    %v100 = vunpack.c.l.b16 %v64
    %v101 = vunpack.c.l.b16 %v65
    %v102 = vunpack.c.l.b16 %v66
    %v103 = vunpack.c.l.b16 %v67
    %v104 = vunpack.c.l.b16 %v68
    %v105 = vunpack.c.l.b16 %v69
    %v106 = vunpack.c.l.b16 %v70
    %v107 = vunpack.c.l.b16 %v71
    %v108 = vunpack.c.l.b16 %v72
    %v109 = vunpack.c.l.b16 %v73
    %v110 = vunpack.c.l.b16 %v74
    %v111 = vunpack.c.l.b16 %v75
    %v112 = vunpack.c.l.b16 %v76
    %v113 = vunpack.c.l.b16 %v77
    %v114 = vunpack.c.l.b16 %v78
    %v115 = vpack.c.b16 %v100, %v99
    %v116 = vpack.c.b16 %v102, %v101
    %v117 = vpack.c.b16 %v104, %v103
    %v118 = vpack.c.b16 %v106, %v105
    %v119 = vpack.c.b16 %v108, %v107
    %v120 = vpack.c.b16 %v110, %v109
    %v121 = vpack.c.b16 %v112, %v111
    %v122 = vpack.c.b16 %v114, %v113
    %131 = vmatpush.bf16.msra.mxu0 %v122
    %132 = vmatpush.bf16.msra.mxu0 %v121
    %133 = vmatpush.bf16.msra.mxu0 %v120
    %134 = vmatpush.bf16.msra.mxu0 %v119
    %135 = vmatpush.bf16.msra.mxu0 %v118
    %136 = vmatpush.bf16.msra.mxu0 %v117
    %137 = vmatpush.bf16.msra.mxu0 %v116
    %138 = vmatpush.bf16.msra.mxu0 %v115
    %139 = vmatmul.bf16.gmra.mxu0 %v62
    %v140 = vpop.f32.mrf.mxu0
    %v141 = vadd.f32 %v81, %v140
    %v142 = vpop.f32.mrf.mxu0
    %143 = vdwg.mxu0
    %v144 = vpack.c.bf16 %v141, %v141
    %vm145 = vcmask 519168
    %146 = vst.msk [vmem:[#allocation2] sm:$0xf] %vm145, %v144
    // Predicated region
    $region22: #{tpu_custom_call.1} parent=1 // pred_check
      _
    $region23: #{tpu_custom_call.1} parent=1 // pred_check_branch
      %148 = sbr.rel (0) target = $region25
    $region24: #{tpu_custom_call.1} parent=1 // pred_region
      %150 = vsyncadd [#allocation3], 0
      %s152 = sshll.u32 [#allocation2], 4
      %s153 = int_to_ptr.vmem [resolvable:$true] %s152
      %s154 = sshll.u32 %s5, 4
      %s155 = int_to_ptr.hbm [resolvable:$true] %s154
      %157 = dma.vmem_to_hbm [thread:$0]  %s153, 64, %s155, [#allocation3]
    $region25: #{tpu_custom_call.1} parent=1 // pred_fallthru
      _
    // Predicated region
    $region26: #{tpu_custom_call.1} parent=1 // pred_check
      _
    $region27: #{tpu_custom_call.1} parent=1 // pred_check_branch
      %159 = sbr.rel (0) target = $region29
    $region28: #{tpu_custom_call.1} parent=1 // pred_region
      %161 = dma.done [#allocation3], 64
    $region29: #{tpu_custom_call.1} parent=1 // pred_fallthru
      _
    %162 = vsyncpa [#allocation3], 1

// kernel: tpu_custom_call.1
$region0: #{tpu_custom_call.1}
  #allocation0 [shape = 'u32[]', space=smem, size = 0x4, offset = 0x4, fixed_abs, tag = 'smem constant byte address 0x4 - core index']
  #allocation1 [shape = 'u32[72,128]{1,0:T(1,128)}', space=vmem, size = 0x9000, scoped, tag = 'internal scratch']
  %s0 = inlined_call_operand.vmem [shape: f32[8,32], index: 0, kind: input, shape index: {}]
  %s1 = inlined_call_operand.vmem [shape: bf16[32,128], index: 1, kind: input, shape index: {}]
  %s2 = inlined_call_operand.vmem [shape: f32[1,128], index: 2, kind: input, shape index: {}]
  %s3 = inlined_call_operand.vmem [shape: bf16[128,64], index: 3, kind: input, shape index: {}]
  %s4 = inlined_call_operand.vmem [shape: f32[1,64], index: 4, kind: input, shape index: {}]
  %s5 = inlined_call_operand.hbm [shape: bf16[8,64], index: 5, kind: output, shape index: {}]
  %s6 = sld [smem:[#allocation0]]
  $region30: #{tpu_custom_call.1} parent=0
    _
  %s8 = ssub.s32 1, %s6
  %s9 = scalar_select 0, %s8, %s6
  $region1: #{tpu_custom_call.1} parent=0
    #allocation2 [shape = 'u8[2048]{0}', space=vmem, size = 0x800, scoped, tag = 'output window, operand 0, single buffered']
    #allocation3 [shape = 's32[1]{0}', space=sflag, size = 0x4, scoped, tag = 'scoped memory for tpu_custom_call.1']
    %10 = vsyncpa [#allocation3], 0
    // Predicated region
    $region2: #{tpu_custom_call.1} parent=1 // pred_check
      _
    $region3: #{tpu_custom_call.1} parent=1 // pred_check_branch
      %12 = sbr.rel (0) target = $region5
    $region4: #{tpu_custom_call.1} parent=1 // pred_region
      _
    $region5: #{tpu_custom_call.1} parent=1 // pred_fallthru
      _
    // Predicated region
    $region6: #{tpu_custom_call.1} parent=1 // pred_check
      _
    $region7: #{tpu_custom_call.1} parent=1 // pred_check_branch
      %14 = sbr.rel (0) target = $region9
    $region8: #{tpu_custom_call.1} parent=1 // pred_region
      _
    $region9: #{tpu_custom_call.1} parent=1 // pred_fallthru
      _
    // Predicated region
    $region10: #{tpu_custom_call.1} parent=1 // pred_check
      _
    $region11: #{tpu_custom_call.1} parent=1 // pred_check_branch
      %16 = sbr.rel (0) target = $region13
    $region12: #{tpu_custom_call.1} parent=1 // pred_region
      _
    $region13: #{tpu_custom_call.1} parent=1 // pred_fallthru
      _
    // Predicated region
    $region14: #{tpu_custom_call.1} parent=1 // pred_check
      _
    $region15: #{tpu_custom_call.1} parent=1 // pred_check_branch
      %18 = sbr.rel (0) target = $region17
    $region16: #{tpu_custom_call.1} parent=1 // pred_region
      _
    $region17: #{tpu_custom_call.1} parent=1 // pred_fallthru
      _
    // Predicated region
    $region18: #{tpu_custom_call.1} parent=1 // pred_check
      _
    $region19: #{tpu_custom_call.1} parent=1 // pred_check_branch
      %20 = sbr.rel (0) target = $region21
    $region20: #{tpu_custom_call.1} parent=1 // pred_region
      _
    $region21: #{tpu_custom_call.1} parent=1 // pred_fallthru
      _
    %v22 = vld [vmem:[%s0] sm:$0xff]
    %v23 = vpack.c.bf16 %v22, %v22
    %v24 = vld [vmem:[%s1] sm:$0xf]
    %v25 = vld [vmem:[%s1 + $0x4] sm:$0xf]
    %v26 = vld [vmem:[%s1 + $0x8] sm:$0xf]
    %v27 = vld [vmem:[%s1 + $0xc] sm:$0xf]
    %v28 = vld [vmem:[%s2] sm:$0x1]
    %v30 = vperm.slane %v28, 0
    %v36 = vunpack.c.l.b16 %v24
    %v37 = vunpack.c.l.b16 %v25
    %v38 = vunpack.c.l.b16 %v26
    %v39 = vunpack.c.l.b16 %v27
    %v40 = vpack.c.b16 %v37, %v36
    %v41 = vpack.c.b16 %v39, %v38
    %vm44 = vcmask 261120
    %v46 = vsel %vm44, %v23, 0
    %48 = vmatpush.bf16.msra.mxu0 0
    %49 = vmatpush.bf16.msra.mxu0 0
    %50 = vmatpush.bf16.msra.mxu0 0
    %51 = vmatpush.bf16.msra.mxu0 0
    %52 = vmatpush.bf16.msra.mxu0 0
    %53 = vmatpush.bf16.msra.mxu0 0
    %54 = vmatpush.bf16.msra.mxu0 %v41
    %55 = vmatpush.bf16.msra.mxu0 %v40
    %56 = vmatmul.bf16.gmra.mxu0 %v46
    %v57 = vpop.f32.mrf.mxu0
    %v58 = vadd.f32 %v30, %v57
    %v59 = vpop.f32.mrf.mxu0
    %60 = vdwg.mxu0
    %v61 = vmax.f32 %v58, 0.0
    %v62 = vpack.c.bf16 %v61, %v61
    %v63 = vld [vmem:[%s3] sm:$0xf]
    %v64 = vld [vmem:[%s3 + $0x4] sm:$0xf]
    %v65 = vld [vmem:[%s3 + $0x8] sm:$0xf]
    %v66 = vld [vmem:[%s3 + $0xc] sm:$0xf]
    %v67 = vld [vmem:[%s3 + $0x10] sm:$0xf]
    %v68 = vld [vmem:[%s3 + $0x14] sm:$0xf]
    %v69 = vld [vmem:[%s3 + $0x18] sm:$0xf]
    %v70 = vld [vmem:[%s3 + $0x1c] sm:$0xf]
    %v71 = vld [vmem:[%s3 + $0x20] sm:$0xf]
    %v72 = vld [vmem:[%s3 + $0x24] sm:$0xf]
    %v73 = vld [vmem:[%s3 + $0x28] sm:$0xf]
    %v74 = vld [vmem:[%s3 + $0x2c] sm:$0xf]
    %v75 = vld [vmem:[%s3 + $0x30] sm:$0xf]
    %v76 = vld [vmem:[%s3 + $0x34] sm:$0xf]
    %v77 = vld [vmem:[%s3 + $0x38] sm:$0xf]
    %v78 = vld [vmem:[%s3 + $0x3c] sm:$0xf]
    %v79 = vld [vmem:[%s4] sm:$0x1]
    %v81 = vperm.slane %v79, 0
    %v99 = vunpack.c.l.b16 %v63
    %v100 = vunpack.c.l.b16 %v64
    %v101 = vunpack.c.l.b16 %v65
    %v102 = vunpack.c.l.b16 %v66
    %v103 = vunpack.c.l.b16 %v67
    %v104 = vunpack.c.l.b16 %v68
    %v105 = vunpack.c.l.b16 %v69
    %v106 = vunpack.c.l.b16 %v70
    %v107 = vunpack.c.l.b16 %v71
    %v108 = vunpack.c.l.b16 %v72
    %v109 = vunpack.c.l.b16 %v73
    %v110 = vunpack.c.l.b16 %v74
    %v111 = vunpack.c.l.b16 %v75
    %v112 = vunpack.c.l.b16 %v76
    %v113 = vunpack.c.l.b16 %v77
    %v114 = vunpack.c.l.b16 %v78
    %v115 = vpack.c.b16 %v100, %v99
    %v116 = vpack.c.b16 %v102, %v101
    %v117 = vpack.c.b16 %v104, %v103
    %v118 = vpack.c.b16 %v106, %v105
    %v119 = vpack.c.b16 %v108, %v107
    %v120 = vpack.c.b16 %v110, %v109
    %v121 = vpack.c.b16 %v112, %v111
    %v122 = vpack.c.b16 %v114, %v113
    %131 = vmatpush.bf16.msra.mxu0 %v122
    %132 = vmatpush.bf16.msra.mxu0 %v121
    %133 = vmatpush.bf16.msra.mxu0 %v120
    %134 = vmatpush.bf16.msra.mxu0 %v119
    %135 = vmatpush.bf16.msra.mxu0 %v118
    %136 = vmatpush.bf16.msra.mxu0 %v117
    %137 = vmatpush.bf16.msra.mxu0 %v116
    %138 = vmatpush.bf16.msra.mxu0 %v115
    %139 = vmatmul.bf16.gmra.mxu0 %v62
    %v140 = vpop.f32.mrf.mxu0
    %v141 = vadd.f32 %v81, %v140
    %v142 = vpop.f32.mrf.mxu0
    %143 = vdwg.mxu0
    %v144 = vpack.c.bf16 %v141, %v141
    %vm145 = vcmask 519168
    %146 = vst.msk [vmem:[#allocation2] sm:$0xf] %vm145, %v144
    // Predicated region
    $region22: #{tpu_custom_call.1} parent=1 // pred_check
      _
    $region23: #{tpu_custom_call.1} parent=1 // pred_check_branch
      %148 = sbr.rel (0) target = $region25
    $region24: #{tpu_custom_call.1} parent=1 // pred_region
      %150 = vsyncadd [#allocation3], 0
      %s152 = sshll.u32 [#allocation2], 4
      %s153 = int_to_ptr.vmem [resolvable:$true] %s152
      %s154 = sshll.u32 %s5, 4
      %s155 = int_to_ptr.hbm [resolvable:$true] %s154
      %157 = dma.vmem_to_hbm [thread:$0]  %s153, 64, %s155, [#allocation3]
    $region25: #{tpu_custom_call.1} parent=1 // pred_fallthru
      _
    // Predicated region
    $region26: #{tpu_custom_call.1} parent=1 // pred_check
      _
    $region27: #{tpu_custom_call.1} parent=1 // pred_check_branch
      %159 = sbr.rel (0) target = $region29
    $region28: #{tpu_custom_call.1} parent=1 // pred_region
      %161 = dma.done [#allocation3], 64
    $region29: #{tpu_custom_call.1} parent=1 // pred_fallthru
      _
    %162 = vsyncpa [#allocation3], 1

</llo_original>
